<compile_context>
chip_gen: v7x
topology: tpu7x:2x2x1
jax: 0.10.0
libtpu: 0.0.40
codegen_flags: <defaults>
</compile_context>

<pallas_src>
import functools
import math

import jax
import jax.numpy as jnp
from jax.experimental import pallas as pl
from jax.experimental.pallas import tpu as pltpu


_LANE = 512             # lane-dense last dim (large multiple of 128 -> unmasked vst)
_MAX_BLOCK_ROWS = 2048  # 2048x512 f32 = 4 MiB / stream; <= ~18 MiB double-buffered
_SUBLANE = 32           # row padding multiple (covers f32 / int16 / int8 sublane tiles)
_VMEM_LIMIT = 48 << 20  # below v7x's 64 MiB physical VMEM; fine on v5e/v6e (128 MiB)


def _round_up(x, m):
    return ((x + m - 1) // m) * m


# ----------------------------------------------------------------------------
# Pallas kernel: out = w_pre * counts * (1/num_samples)
# (w_pre = W / probability_div, pre-masked to 0 where probability_div == 0)
# ----------------------------------------------------------------------------
def _sparsify_kernel(w_ref, counts_ref, out_ref, *, inv_num_samples):
    gamma = counts_ref[...].astype(jnp.float32) * inv_num_samples
    out_ref[...] = (w_ref[...] * gamma).astype(out_ref.dtype)


def sparsify_pallas(w_slab, counts_slab, num_samples, block_rows):
    """Elementwise rescale on a lane-dense (n_rows, _LANE) slab, tiled over rows."""
    n_rows, lane = w_slab.shape
    assert lane % 128 == 0 and n_rows % _SUBLANE == 0

    kernel = functools.partial(
        _sparsify_kernel, inv_num_samples=1.0 / float(num_samples)
    )
    grid = (pl.cdiv(n_rows, block_rows),)  # ragged last block is handled by Pallas
    return pl.pallas_call(
        kernel,
        out_shape=jax.ShapeDtypeStruct((n_rows, lane), w_slab.dtype),
        grid=grid,
        in_specs=[
            pl.BlockSpec((block_rows, lane), lambda i: (i, 0)),
            pl.BlockSpec((block_rows, lane), lambda i: (i, 0)),
        ],
        out_specs=pl.BlockSpec((block_rows, lane), lambda i: (i, 0)),
        compiler_params=pltpu.CompilerParams(
            dimension_semantics=("parallel",),   # megacore-shardable on v7x
            vmem_limit_bytes=_VMEM_LIMIT,
        ),
    )(w_slab, counts_slab)


# ----------------------------------------------------------------------------
# Plain-JAX glue: per-neuron multinomial edge sampling via bincount.
# ----------------------------------------------------------------------------
def _multinomial_counts(key, probability2d, num_samples):
    """For each row, draw `num_samples` categorical samples and count them (int32)."""
    c_out, fan_in = probability2d.shape
    logits = jnp.where(
        probability2d > 0,
        jnp.log(jnp.maximum(probability2d, 1e-38)),
        -jnp.inf,  # zero-probability edges are never sampled
    )
    keys = jax.random.split(key, c_out)

    def per_row(k, row_logits):
        idx = jax.random.categorical(k, row_logits, shape=(num_samples,))
        return jnp.zeros((fan_in,), jnp.int32).at[idx].add(1)

    return jax.vmap(per_row)(keys, logits)


def _to_slab(flat, total, n_rows_pad, lane, dtype):
    flat = flat.astype(dtype)
    flat = jnp.pad(flat, (0, n_rows_pad * lane - total))
    return flat.reshape(n_rows_pad, lane)


# ----------------------------------------------------------------------------
# Module-equivalent wrapper.
# ----------------------------------------------------------------------------
class BaseSparsifierPallas:
    """JAX/Pallas equivalent of torchprune BaseSparsifier."""

    def __init__(self, tensor, probability, probability_div):
        self._tensor = tensor                    # (C_out, C_in, kH, kW)
        self._probability = probability          # same shape
        self._shape = tensor.shape
        self._c_out = self._shape[0]
        self._fan_in = math.prod(self._shape[1:])    # static shape math
        self._total = self._c_out * self._fan_in

        # Fuse the static operands once: w_pre = W / pdiv (0 where pdiv == 0).
        pdiv = probability_div.astype(jnp.float32)
        inv_pdiv = jnp.where(pdiv > 0.0, 1.0 / jnp.where(pdiv > 0.0, pdiv, 1.0), 0.0)
        w_pre = tensor.astype(jnp.float32) * inv_pdiv

        # Lane-dense padded layout (rows padded only to the sublane tile).
        n_rows = pl.cdiv(self._total, _LANE)
        self._n_rows_pad = _round_up(n_rows, _SUBLANE)
        self._block_rows = min(_MAX_BLOCK_ROWS, self._n_rows_pad)

        # Cache the static slab once; only `counts` is rebuilt per sparsify call.
        self._w_slab = _to_slab(
            w_pre.reshape(-1), self._total, self._n_rows_pad, _LANE, jnp.float32
        )
        # Cache the 2-D probability view used by the sampler.
        self._p2d = probability.reshape(self._c_out, self._fan_in).astype(jnp.float32)

    def sparsify(self, num_samples, key):
        # --- sample counts per neuron (plain JAX glue) ---
        # TODO(synk): longer-term, fuse the multinomial draw on-chip with
        # pltpu.prng_seed / pltpu.prng_random_bits so counts never touches HBM.
        counts = _multinomial_counts(key, self._p2d, num_samples)  # (c_out, fan_in) i32

        # Narrowest exact dtype for the counts stream (counts <= num_samples).
        if num_samples <= 127:
            counts_dtype = jnp.int8
        elif num_samples < (1 << 15):
            counts_dtype = jnp.int16
        else:
            counts_dtype = jnp.int32

        c_slab = _to_slab(
            counts.reshape(-1), self._total, self._n_rows_pad, _LANE, counts_dtype
        )
        out_slab = sparsify_pallas(self._w_slab, c_slab, num_samples, self._block_rows)
        return out_slab.reshape(-1)[: self._total].reshape(self._shape)

    def forward(self, x):
        """PyTorch forward has an empty body (returns None); preserved exactly."""
        # TODO(synk): BaseSparsifier.forward has no tensor compute to lower to Pallas.
        return None

    __call__ = forward


if __name__ == "__main__":
    key = jax.random.PRNGKey(0)
    k_w, k_p, k_x, k_s = jax.random.split(key, 4)

    # Conv-layer weight the pruner would hand us: OIHW = (8, 4, 3, 3)
    c_out, c_in, kh, kw = 8, 4, 3, 3
    tensor = jax.random.normal(k_w, (c_out, c_in, kh, kw), dtype=jnp.float32)

    # Sampling probabilities proportional to |w|, normalized per output neuron;
    # probability_div = probability (typical pruner choice).
    absw = jnp.abs(tensor).reshape(c_out, -1)
    prob = (absw / jnp.sum(absw, axis=1, keepdims=True)).reshape(tensor.shape)
    prob_div = prob

    sparsifier = BaseSparsifierPallas(tensor, prob, prob_div)

    # Forward input (NCHW, like PyTorch) — unused by the no-op forward.
    x = jax.random.normal(k_x, (2, 4, 16, 16), dtype=jnp.float32)
    out_fwd = sparsifier(x)
    assert out_fwd is None  # exact forward semantics

    # Run the sparsify hot path through the Pallas kernel.
    num_samples = 64
    w_sparse = sparsifier.sparsify(num_samples, k_s)
    jax.block_until_ready(w_sparse)

    # Reference check in plain JAX (same counts, same formula).
    counts_ref = _multinomial_counts(
        k_s, prob.reshape(c_out, -1).astype(jnp.float32), num_samples
    ).astype(jnp.float32)
    denom = num_samples * prob_div.reshape(c_out, -1)
    gamma_ref = jnp.where(denom > 0, counts_ref / jnp.where(denom > 0, denom, 1.0), 0.0)
    ref = (tensor.reshape(c_out, -1) * gamma_ref).reshape(tensor.shape)
    assert jnp.allclose(w_sparse, ref, atol=1e-5, rtol=1e-5)

    print("KERNEL_OK")
</pallas_src>

<mosaic_0001>
module attributes {stable_mosaic.version = 11 : i64} {
  func.func @_sparsify_kernel(%arg0: i32, %arg1: memref<32x512xf32, #tpu.memory_space<vmem>>, %arg2: memref<32x512xi8, #tpu.memory_space<vmem>>, %arg3: memref<32x512xf32, #tpu.memory_space<vmem>>) attributes {dimension_semantics = [#tpu.dimension_semantics<parallel>], iteration_bounds = array<i64: 1>, scalar_prefetch = 0 : i64, scratch_operands = 0 : i64, tpu.core_type = #tpu.core_type<tc>, window_params = [{transform_indices = @transform_0, window_bounds = array<i64: 32, 512>}, {transform_indices = @transform_1, window_bounds = array<i64: 32, 512>}, {transform_indices = @transform_2, window_bounds = array<i64: 32, 512>}]} {
    %c0 = arith.constant 0 : index
    %c0_0 = arith.constant 0 : index
    %0 = vector.load %arg2[%c0, %c0_0] : memref<32x512xi8, #tpu.memory_space<vmem>>, vector<32x512xi8>
    %1 = arith.sitofp %0 : vector<32x512xi8> to vector<32x512xf32>
    %cst = arith.constant 1.562500e-02 : f32
    %2 = vector.broadcast %cst : f32 to vector<32x512xf32>
    %3 = arith.mulf %1, %2 : vector<32x512xf32>
    %c0_1 = arith.constant 0 : index
    %c0_2 = arith.constant 0 : index
    %4 = vector.load %arg1[%c0_1, %c0_2] : memref<32x512xf32, #tpu.memory_space<vmem>>, vector<32x512xf32>
    %5 = arith.mulf %4, %3 : vector<32x512xf32>
    %c0_3 = arith.constant 0 : index
    %c0_4 = arith.constant 0 : index
    %6 = vector.load %arg3[%c0_3, %c0_4] : memref<32x512xf32, #tpu.memory_space<vmem>>, vector<32x512xf32>
    tpu.vector_store %arg3[%c0_3, %c0_4], %5 {strides = array<i32>} : memref<32x512xf32, #tpu.memory_space<vmem>>, vector<32x512xf32>,
    return
  }
  func.func @transform_0(%arg0: i32) -> (i32, i32) {
    %c0_i32 = arith.constant 0 : i32
    %c0_i32_0 = arith.constant 0 : i32
    return %arg0, %c0_i32 : i32, i32
  }
  func.func @transform_1(%arg0: i32) -> (i32, i32) {
    %c0_i32 = arith.constant 0 : i32
    %c0_i32_0 = arith.constant 0 : i32
    return %arg0, %c0_i32 : i32, i32
  }
  func.func @transform_2(%arg0: i32) -> (i32, i32) {
    %c0_i32 = arith.constant 0 : i32
    %c0_i32_0 = arith.constant 0 : i32
    return %arg0, %c0_i32 : i32, i32
  }
}

</mosaic_0001>

<llo_original>
// kernel: tpu_custom_call.1
$region0: #{tpu_custom_call.1}
  #allocation0 [shape = 'u32[]', space=smem, size = 0x4, offset = 0x4, fixed_abs, tag = 'smem constant byte address 0x4 - core index']
  #allocation1 [shape = 'u32[144,128]{1,0:T(1,128)}', space=vmem, size = 0x12000, scoped, tag = 'internal scratch']
  %s0 = inlined_call_operand.hbm [shape: f32[32,512], index: 0, kind: input, shape index: {}]
  %s1 = inlined_call_operand.hbm [shape: s8[32,512], index: 1, kind: input, shape index: {}]
  %s2 = inlined_call_operand.hbm [shape: f32[32,512], index: 2, kind: output, shape index: {}]
  %s3 = sld [smem:[#allocation0]]
  $region26: #{tpu_custom_call.1} parent=0
    _
  %s5 = ssub.s32 1, %s3
  %s6 = scalar_select 0, %s5, %s3
  $region1: #{tpu_custom_call.1} parent=0
    #allocation2 [shape = 'u8[65536]{0}', space=vmem, size = 0x10000, scoped, tag = 'input window, operand 0, single buffered']
    #allocation3 [shape = 's32[1]{0}', space=sflag, size = 0x4, scoped, tag = 'scoped memory for tpu_custom_call.1']
    #allocation4 [shape = 's32[1]{0}', space=sflag, size = 0x4, scoped, tag = 'scoped memory for tpu_custom_call.1']
    #allocation5 [shape = 'u8[16384]{0}', space=vmem, size = 0x4000, scoped, tag = 'input window, operand 1, single buffered']
    #allocation6 [shape = 's32[1]{0}', space=sflag, size = 0x4, scoped, tag = 'scoped memory for tpu_custom_call.1']
    #allocation7 [shape = 'u8[65536]{0}', space=vmem, size = 0x10000, scoped, tag = 'output window, operand 0, single buffered']
    %7 = vsyncpa [#allocation3], 0
    %8 = vsyncpa [#allocation6], 0
    %9 = vsyncpa [#allocation4], 0
    // Predicated region
    $region2: #{tpu_custom_call.1} parent=1 // pred_check
      _
    $region3: #{tpu_custom_call.1} parent=1 // pred_check_branch
      %11 = sbr.rel (0) target = $region5
    $region4: #{tpu_custom_call.1} parent=1 // pred_region
      %s13 = ssub.s32 2048, 2048
      %14 = vsyncadd [#allocation3], %s13
      %s15 = sshll.u32 [#allocation2], 4
      %s16 = int_to_ptr.vmem [resolvable:$true] %s15
      %21 = dma.hbm_to_vmem [thread:$0]  %s0, 2048, %s16, [#allocation3], 512, 512, 32
    $region5: #{tpu_custom_call.1} parent=1 // pred_fallthru
      _
    // Predicated region
    $region6: #{tpu_custom_call.1} parent=1 // pred_check
      _
    $region7: #{tpu_custom_call.1} parent=1 // pred_check_branch
      %23 = sbr.rel (0) target = $region9
    $region8: #{tpu_custom_call.1} parent=1 // pred_region
      %s25 = ssub.s32 512, 512
      %26 = vsyncadd [#allocation6], %s25
      %s28 = sshll.u32 [#allocation5], 4
      %s29 = int_to_ptr.vmem [resolvable:$true] %s28
      %31 = dma.hbm_to_vmem [thread:$0]  %s1, 512, %s29, [#allocation6]
    $region9: #{tpu_custom_call.1} parent=1 // pred_fallthru
      _
    // Predicated region
    $region10: #{tpu_custom_call.1} parent=1 // pred_check
      _
    $region11: #{tpu_custom_call.1} parent=1 // pred_check_branch
      %33 = sbr.rel (0) target = $region13
    $region12: #{tpu_custom_call.1} parent=1 // pred_region
      %34 = dma.done [#allocation3], 2048
    $region13: #{tpu_custom_call.1} parent=1 // pred_fallthru
      _
    // Predicated region
    $region14: #{tpu_custom_call.1} parent=1 // pred_check
      _
    $region15: #{tpu_custom_call.1} parent=1 // pred_check_branch
      %36 = sbr.rel (0) target = $region17
    $region16: #{tpu_custom_call.1} parent=1 // pred_region
      %37 = dma.done [#allocation6], 512
    $region17: #{tpu_custom_call.1} parent=1 // pred_fallthru
      _
    %v38 = vld [vmem:[#allocation5] sm:$0xff]
    %v39 = vld [vmem:[#allocation5 + $0x8] sm:$0xff]
    %v40 = vld [vmem:[#allocation5 + $0x10] sm:$0xff]
    %v41 = vld [vmem:[#allocation5 + $0x18] sm:$0xff]
    %v42 = vunpack.c.0.s8 %v38
    %v43 = vunpack.c.0.s8 %v39
    %v44 = vunpack.c.0.s8 %v40
    %v45 = vunpack.c.0.s8 %v41
    %v46 = vunpack.c.1.s8 %v38
    %v47 = vunpack.c.1.s8 %v39
    %v48 = vunpack.c.1.s8 %v40
    %v49 = vunpack.c.1.s8 %v41
    %v50 = vunpack.c.2.s8 %v38
    %v51 = vunpack.c.2.s8 %v39
    %v52 = vunpack.c.2.s8 %v40
    %v53 = vunpack.c.2.s8 %v41
    %v54 = vunpack.c.3.s8 %v38
    %v55 = vunpack.c.3.s8 %v39
    %v56 = vunpack.c.3.s8 %v40
    %v57 = vunpack.c.3.s8 %v41
    %v58 = vcvt.s32.f32 %v42
    %v59 = vcvt.s32.f32 %v43
    %v60 = vcvt.s32.f32 %v44
    %v61 = vcvt.s32.f32 %v45
    %v62 = vcvt.s32.f32 %v46
    %v63 = vcvt.s32.f32 %v47
    %v64 = vcvt.s32.f32 %v48
    %v65 = vcvt.s32.f32 %v49
    %v66 = vcvt.s32.f32 %v50
    %v67 = vcvt.s32.f32 %v51
    %v68 = vcvt.s32.f32 %v52
    %v69 = vcvt.s32.f32 %v53
    %v70 = vcvt.s32.f32 %v54
    %v71 = vcvt.s32.f32 %v55
    %v72 = vcvt.s32.f32 %v56
    %v73 = vcvt.s32.f32 %v57
    %v74 = vmul.f32 %v58, 0.015625
    %v75 = vmul.f32 %v59, 0.015625
    %v76 = vmul.f32 %v60, 0.015625
    %v77 = vmul.f32 %v61, 0.015625
    %v78 = vmul.f32 %v62, 0.015625
    %v79 = vmul.f32 %v63, 0.015625
    %v80 = vmul.f32 %v64, 0.015625
    %v81 = vmul.f32 %v65, 0.015625
    %v82 = vmul.f32 %v66, 0.015625
    %v83 = vmul.f32 %v67, 0.015625
    %v84 = vmul.f32 %v68, 0.015625
    %v85 = vmul.f32 %v69, 0.015625
    %v86 = vmul.f32 %v70, 0.015625
    %v87 = vmul.f32 %v71, 0.015625
    %v88 = vmul.f32 %v72, 0.015625
    %v89 = vmul.f32 %v73, 0.015625
    %v90 = vld [vmem:[#allocation2] sm:$0xff]
    %v91 = vld [vmem:[#allocation2 + $0x8] sm:$0xff]
    %v92 = vld [vmem:[#allocation2 + $0x10] sm:$0xff]
    %v93 = vld [vmem:[#allocation2 + $0x18] sm:$0xff]
    %v94 = vld [vmem:[#allocation2 + $0x20] sm:$0xff]
    %v95 = vld [vmem:[#allocation2 + $0x28] sm:$0xff]
    %v96 = vld [vmem:[#allocation2 + $0x30] sm:$0xff]
    %v97 = vld [vmem:[#allocation2 + $0x38] sm:$0xff]
    %v98 = vld [vmem:[#allocation2 + $0x40] sm:$0xff]
    %v99 = vld [vmem:[#allocation2 + $0x48] sm:$0xff]
    %v100 = vld [vmem:[#allocation2 + $0x50] sm:$0xff]
    %v101 = vld [vmem:[#allocation2 + $0x58] sm:$0xff]
    %v102 = vld [vmem:[#allocation2 + $0x60] sm:$0xff]
    %v103 = vld [vmem:[#allocation2 + $0x68] sm:$0xff]
    %v104 = vld [vmem:[#allocation2 + $0x70] sm:$0xff]
    %v105 = vld [vmem:[#allocation2 + $0x78] sm:$0xff]
    %v106 = vmul.f32 %v90, %v74
    %v107 = vmul.f32 %v91, %v75
    %v108 = vmul.f32 %v92, %v76
    %v109 = vmul.f32 %v93, %v77
    %v110 = vmul.f32 %v94, %v78
    %v111 = vmul.f32 %v95, %v79
    %v112 = vmul.f32 %v96, %v80
    %v113 = vmul.f32 %v97, %v81
    %v114 = vmul.f32 %v98, %v82
    %v115 = vmul.f32 %v99, %v83
    %v116 = vmul.f32 %v100, %v84
    %v117 = vmul.f32 %v101, %v85
    %v118 = vmul.f32 %v102, %v86
    %v119 = vmul.f32 %v103, %v87
    %v120 = vmul.f32 %v104, %v88
    %v121 = vmul.f32 %v105, %v89
    %122 = vst [vmem:[#allocation7] sm:$0xff] %v106
    %123 = vst [vmem:[#allocation7 + $0x8] sm:$0xff] %v107
    %124 = vst [vmem:[#allocation7 + $0x10] sm:$0xff] %v108
    %125 = vst [vmem:[#allocation7 + $0x18] sm:$0xff] %v109
    %126 = vst [vmem:[#allocation7 + $0x20] sm:$0xff] %v110
    %127 = vst [vmem:[#allocation7 + $0x28] sm:$0xff] %v111
    %128 = vst [vmem:[#allocation7 + $0x30] sm:$0xff] %v112
    %129 = vst [vmem:[#allocation7 + $0x38] sm:$0xff] %v113
    %130 = vst [vmem:[#allocation7 + $0x40] sm:$0xff] %v114
    %131 = vst [vmem:[#allocation7 + $0x48] sm:$0xff] %v115
    %132 = vst [vmem:[#allocation7 + $0x50] sm:$0xff] %v116
    %133 = vst [vmem:[#allocation7 + $0x58] sm:$0xff] %v117
    %134 = vst [vmem:[#allocation7 + $0x60] sm:$0xff] %v118
    %135 = vst [vmem:[#allocation7 + $0x68] sm:$0xff] %v119
    %136 = vst [vmem:[#allocation7 + $0x70] sm:$0xff] %v120
    %137 = vst [vmem:[#allocation7 + $0x78] sm:$0xff] %v121
    // Predicated region
    $region18: #{tpu_custom_call.1} parent=1 // pred_check
      _
    $region19: #{tpu_custom_call.1} parent=1 // pred_check_branch
      %139 = sbr.rel (0) target = $region21
    $region20: #{tpu_custom_call.1} parent=1 // pred_region
      %s141 = ssub.s32 2048, 2048
      %142 = vsyncadd [#allocation4], %s141
      %s143 = sshll.u32 [#allocation7], 4
      %s144 = int_to_ptr.vmem [resolvable:$true] %s143
      %149 = dma.vmem_to_hbm [thread:$0]  %s144, 2048, %s2, [#allocation4], 512, 512, 32
    $region21: #{tpu_custom_call.1} parent=1 // pred_fallthru
      _
    // Predicated region
    $region22: #{tpu_custom_call.1} parent=1 // pred_check
      _
    $region23: #{tpu_custom_call.1} parent=1 // pred_check_branch
      %151 = sbr.rel (0) target = $region25
    $region24: #{tpu_custom_call.1} parent=1 // pred_region
      %152 = dma.done [#allocation4], 2048
    $region25: #{tpu_custom_call.1} parent=1 // pred_fallthru
      _
    %153 = vsyncpa [#allocation3], 1
    %154 = vsyncpa [#allocation6], 1
    %155 = vsyncpa [#allocation4], 1

</llo_original>
